<compile_context>
chip_gen: v7x
topology: tpu7x:2x2x1
jax: 0.10.0
libtpu: 0.0.40
codegen_flags: <defaults>
</compile_context>

<pallas_src>
import jax
import jax.numpy as jnp
from jax.experimental import pallas as pl
from jax.experimental.pallas import tpu as pltpu

HIDDEN = 10
LANES = 128

# Flat parameter slab offsets (f32, length 141):
W1_OFF = 0                           # w1[j]          j in [0,10)
B1_OFF = W1_OFF + HIDDEN             # b1[j]
W2_OFF = B1_OFF + HIDDEN             # w2[j, k] at W2_OFF + j*10 + k
B2_OFF = W2_OFF + HIDDEN * HIDDEN    # b2[j]
W3_OFF = B2_OFF + HIDDEN             # w3[j]
B3_OFF = W3_OFF + HIDDEN             # b3
N_PARAMS = B3_OFF + 1                # 141


def mlp_kernel(p_ref, x_ref, o_ref):
    """p_ref: SMEM (141,) f32 (scalar prefetch); x_ref/o_ref: VMEM (TR, 128)."""
    x = x_ref[...]                                         # dense (TR, 128)

    # fc1 + relu: fan_in == 1 -> 10 per-channel planes, scalar-splat FMAs.
    h1 = [
        jnp.maximum(p_ref[W1_OFF + j] * x + p_ref[B1_OFF + j], 0.0)
        for j in range(HIDDEN)
    ]

    # fc2 + relu: per output channel, 10 scalar*plane FMAs with a 2-way
    # accumulation tree; bias added once at the end (no broadcast_to).
    h2 = []
    for j in range(HIDDEN):
        base = W2_OFF + j * HIDDEN
        a0 = p_ref[base + 0] * h1[0]
        a1 = p_ref[base + 1] * h1[1]
        for k in range(2, HIDDEN, 2):
            a0 = a0 + p_ref[base + k] * h1[k]
            a1 = a1 + p_ref[base + k + 1] * h1[k + 1]
        h2.append(jnp.maximum(a0 + a1 + p_ref[B2_OFF + j], 0.0))

    # fc3: 10 scalar*plane FMAs (2-way tree) + bias. No cross-sublane reduce.
    o0 = p_ref[W3_OFF + 0] * h2[0]
    o1 = p_ref[W3_OFF + 1] * h2[1]
    for j in range(2, HIDDEN, 2):
        o0 = o0 + p_ref[W3_OFF + j] * h2[j]
        o1 = o1 + p_ref[W3_OFF + j + 1] * h2[j + 1]
    o_ref[...] = (o0 + o1 + p_ref[B3_OFF]).astype(o_ref.dtype)


def nonlinear_model(x, params, *, max_tile_rows=512):
    """x: (N, 1) float32; params: flat (141,) f32 slab. Returns (N, 1) f32."""
    n = x.shape[0]
    rows = pl.cdiv(n, LANES)
    rows = max(((rows + 7) // 8) * 8, 8)                  # sublane-align rows
    tile_rows = min(max_tile_rows, rows)                  # (8,128)-divisible
    rows_pad = pl.cdiv(rows, tile_rows) * tile_rows
    n_pad = rows_pad * LANES

    xf = x.reshape(-1)
    if n_pad != n:                                        # <= ~1 tile of pad
        xf = jnp.pad(xf, (0, n_pad - n))
    x2 = xf.reshape(rows_pad, LANES)                      # batch -> dense 2D

    out = pl.pallas_call(
        mlp_kernel,
        out_shape=jax.ShapeDtypeStruct((rows_pad, LANES), jnp.float32),
        grid_spec=pltpu.PrefetchScalarGridSpec(
            num_scalar_prefetch=1,                        # params -> SMEM
            grid=(rows_pad // tile_rows,),
            in_specs=[
                pl.BlockSpec((tile_rows, LANES), lambda i, p: (i, 0)),
            ],
            out_specs=pl.BlockSpec((tile_rows, LANES), lambda i, p: (i, 0)),
        ),
        compiler_params=pltpu.CompilerParams(
            dimension_semantics=("parallel",)),
    )(params, x2)
    return out.reshape(-1)[:n].reshape(n, 1)


def init_params(key):
    """PyTorch nn.Linear-style init: uniform(-1/sqrt(fan_in), 1/sqrt(fan_in))."""
    ks = jax.random.split(key, 6)

    def lin(kw, kb, fan_in, fan_out):
        bound = 1.0 / (fan_in ** 0.5)
        w = jax.random.uniform(kw, (fan_out, fan_in), jnp.float32, -bound, bound)
        b = jax.random.uniform(kb, (fan_out,), jnp.float32, -bound, bound)
        return w, b

    w1, b1 = lin(ks[0], ks[1], 1, HIDDEN)
    w2, b2 = lin(ks[2], ks[3], HIDDEN, HIDDEN)
    w3, b3 = lin(ks[4], ks[5], HIDDEN, 1)
    return w1, b1, w2, b2, w3, b3


def pack_params(w1, b1, w2, b2, w3, b3):
    """Flatten all params into one (141,) f32 slab (layout per *_OFF above)."""
    flat = jnp.concatenate([
        w1.reshape(-1),        # W1_OFF
        b1.reshape(-1),        # B1_OFF
        w2.reshape(-1),        # W2_OFF (row-major: [j, k])
        b2.reshape(-1),        # B2_OFF
        w3.reshape(-1),        # W3_OFF
        b3.reshape(-1),        # B3_OFF
    ]).astype(jnp.float32)
    assert flat.shape == (N_PARAMS,)
    return flat


if __name__ == "__main__":
    key = jax.random.PRNGKey(0)
    w1, b1, w2, b2, w3, b3 = init_params(key)
    params = pack_params(w1, b1, w2, b2, w3, b3)

    # Matches the PyTorch spec: x = torch.linspace(1, 10, 100).unsqueeze(1)
    n = 100
    x = jnp.linspace(1.0, 10.0, n, dtype=jnp.float32).reshape(n, 1)

    out = nonlinear_model(x, params)
    jax.block_until_ready(out)

    # Plain-JAX reference with PyTorch semantics (x @ W.T + b).
    h1 = jnp.maximum(x @ w1.T + b1, 0.0)
    h2 = jnp.maximum(h1 @ w2.T + b2, 0.0)
    ref = h2 @ w3.T + b3
    assert out.shape == (n, 1)
    assert jnp.allclose(out, ref, atol=1e-5, rtol=1e-5)

    print("KERNEL_OK")
</pallas_src>

<mosaic_0001>
module attributes {stable_mosaic.version = 11 : i64} {
  func.func @mlp_kernel(%arg0: i32, %arg1: memref<141xf32, #tpu.memory_space<smem>>, %arg2: memref<8x128xf32, #tpu.memory_space<vmem>>, %arg3: memref<8x128xf32, #tpu.memory_space<vmem>>) attributes {dimension_semantics = [#tpu.dimension_semantics<parallel>], iteration_bounds = array<i64: 1>, scalar_prefetch = 1 : i64, scratch_operands = 0 : i64, tpu.core_type = #tpu.core_type<tc>, window_params = [{transform_indices = @transform_0, window_bounds = array<i64: 8, 128>}, {transform_indices = @transform_1, window_bounds = array<i64: 8, 128>}]} {
    %c0 = arith.constant 0 : index
    %c0_0 = arith.constant 0 : index
    %0 = vector.load %arg2[%c0, %c0_0] : memref<8x128xf32, #tpu.memory_space<vmem>>, vector<8x128xf32>
    %c0_1 = arith.constant 0 : index
    %1 = memref.load %arg1[%c0_1] : memref<141xf32, #tpu.memory_space<smem>>
    %2 = vector.broadcast %1 : f32 to vector<8x128xf32>
    %3 = arith.mulf %2, %0 : vector<8x128xf32>
    %c10 = arith.constant 10 : index
    %4 = memref.load %arg1[%c10] : memref<141xf32, #tpu.memory_space<smem>>
    %5 = vector.broadcast %4 : f32 to vector<8x128xf32>
    %6 = arith.addf %3, %5 : vector<8x128xf32>
    %cst = arith.constant 0.000000e+00 : f32
    %7 = vector.broadcast %cst : f32 to vector<8x128xf32>
    %8 = arith.maximumf %6, %7 : vector<8x128xf32>
    %c1 = arith.constant 1 : index
    %9 = memref.load %arg1[%c1] : memref<141xf32, #tpu.memory_space<smem>>
    %10 = vector.broadcast %9 : f32 to vector<8x128xf32>
    %11 = arith.mulf %10, %0 : vector<8x128xf32>
    %c11 = arith.constant 11 : index
    %12 = memref.load %arg1[%c11] : memref<141xf32, #tpu.memory_space<smem>>
    %13 = vector.broadcast %12 : f32 to vector<8x128xf32>
    %14 = arith.addf %11, %13 : vector<8x128xf32>
    %cst_2 = arith.constant 0.000000e+00 : f32
    %15 = vector.broadcast %cst_2 : f32 to vector<8x128xf32>
    %16 = arith.maximumf %14, %15 : vector<8x128xf32>
    %c2 = arith.constant 2 : index
    %17 = memref.load %arg1[%c2] : memref<141xf32, #tpu.memory_space<smem>>
    %18 = vector.broadcast %17 : f32 to vector<8x128xf32>
    %19 = arith.mulf %18, %0 : vector<8x128xf32>
    %c12 = arith.constant 12 : index
    %20 = memref.load %arg1[%c12] : memref<141xf32, #tpu.memory_space<smem>>
    %21 = vector.broadcast %20 : f32 to vector<8x128xf32>
    %22 = arith.addf %19, %21 : vector<8x128xf32>
    %cst_3 = arith.constant 0.000000e+00 : f32
    %23 = vector.broadcast %cst_3 : f32 to vector<8x128xf32>
    %24 = arith.maximumf %22, %23 : vector<8x128xf32>
    %c3 = arith.constant 3 : index
    %25 = memref.load %arg1[%c3] : memref<141xf32, #tpu.memory_space<smem>>
    %26 = vector.broadcast %25 : f32 to vector<8x128xf32>
    %27 = arith.mulf %26, %0 : vector<8x128xf32>
    %c13 = arith.constant 13 : index
    %28 = memref.load %arg1[%c13] : memref<141xf32, #tpu.memory_space<smem>>
    %29 = vector.broadcast %28 : f32 to vector<8x128xf32>
    %30 = arith.addf %27, %29 : vector<8x128xf32>
    %cst_4 = arith.constant 0.000000e+00 : f32
    %31 = vector.broadcast %cst_4 : f32 to vector<8x128xf32>
    %32 = arith.maximumf %30, %31 : vector<8x128xf32>
    %c4 = arith.constant 4 : index
    %33 = memref.load %arg1[%c4] : memref<141xf32, #tpu.memory_space<smem>>
    %34 = vector.broadcast %33 : f32 to vector<8x128xf32>
    %35 = arith.mulf %34, %0 : vector<8x128xf32>
    %c14 = arith.constant 14 : index
    %36 = memref.load %arg1[%c14] : memref<141xf32, #tpu.memory_space<smem>>
    %37 = vector.broadcast %36 : f32 to vector<8x128xf32>
    %38 = arith.addf %35, %37 : vector<8x128xf32>
    %cst_5 = arith.constant 0.000000e+00 : f32
    %39 = vector.broadcast %cst_5 : f32 to vector<8x128xf32>
    %40 = arith.maximumf %38, %39 : vector<8x128xf32>
    %c5 = arith.constant 5 : index
    %41 = memref.load %arg1[%c5] : memref<141xf32, #tpu.memory_space<smem>>
    %42 = vector.broadcast %41 : f32 to vector<8x128xf32>
    %43 = arith.mulf %42, %0 : vector<8x128xf32>
    %c15 = arith.constant 15 : index
    %44 = memref.load %arg1[%c15] : memref<141xf32, #tpu.memory_space<smem>>
    %45 = vector.broadcast %44 : f32 to vector<8x128xf32>
    %46 = arith.addf %43, %45 : vector<8x128xf32>
    %cst_6 = arith.constant 0.000000e+00 : f32
    %47 = vector.broadcast %cst_6 : f32 to vector<8x128xf32>
    %48 = arith.maximumf %46, %47 : vector<8x128xf32>
    %c6 = arith.constant 6 : index
    %49 = memref.load %arg1[%c6] : memref<141xf32, #tpu.memory_space<smem>>
    %50 = vector.broadcast %49 : f32 to vector<8x128xf32>
    %51 = arith.mulf %50, %0 : vector<8x128xf32>
    %c16 = arith.constant 16 : index
    %52 = memref.load %arg1[%c16] : memref<141xf32, #tpu.memory_space<smem>>
    %53 = vector.broadcast %52 : f32 to vector<8x128xf32>
    %54 = arith.addf %51, %53 : vector<8x128xf32>
    %cst_7 = arith.constant 0.000000e+00 : f32
    %55 = vector.broadcast %cst_7 : f32 to vector<8x128xf32>
    %56 = arith.maximumf %54, %55 : vector<8x128xf32>
    %c7 = arith.constant 7 : index
    %57 = memref.load %arg1[%c7] : memref<141xf32, #tpu.memory_space<smem>>
    %58 = vector.broadcast %57 : f32 to vector<8x128xf32>
    %59 = arith.mulf %58, %0 : vector<8x128xf32>
    %c17 = arith.constant 17 : index
    %60 = memref.load %arg1[%c17] : memref<141xf32, #tpu.memory_space<smem>>
    %61 = vector.broadcast %60 : f32 to vector<8x128xf32>
    %62 = arith.addf %59, %61 : vector<8x128xf32>
    %cst_8 = arith.constant 0.000000e+00 : f32
    %63 = vector.broadcast %cst_8 : f32 to vector<8x128xf32>
    %64 = arith.maximumf %62, %63 : vector<8x128xf32>
    %c8 = arith.constant 8 : index
    %65 = memref.load %arg1[%c8] : memref<141xf32, #tpu.memory_space<smem>>
    %66 = vector.broadcast %65 : f32 to vector<8x128xf32>
    %67 = arith.mulf %66, %0 : vector<8x128xf32>
    %c18 = arith.constant 18 : index
    %68 = memref.load %arg1[%c18] : memref<141xf32, #tpu.memory_space<smem>>
    %69 = vector.broadcast %68 : f32 to vector<8x128xf32>
    %70 = arith.addf %67, %69 : vector<8x128xf32>
    %cst_9 = arith.constant 0.000000e+00 : f32
    %71 = vector.broadcast %cst_9 : f32 to vector<8x128xf32>
    %72 = arith.maximumf %70, %71 : vector<8x128xf32>
    %c9 = arith.constant 9 : index
    %73 = memref.load %arg1[%c9] : memref<141xf32, #tpu.memory_space<smem>>
    %74 = vector.broadcast %73 : f32 to vector<8x128xf32>
    %75 = arith.mulf %74, %0 : vector<8x128xf32>
    %c19 = arith.constant 19 : index
    %76 = memref.load %arg1[%c19] : memref<141xf32, #tpu.memory_space<smem>>
    %77 = vector.broadcast %76 : f32 to vector<8x128xf32>
    %78 = arith.addf %75, %77 : vector<8x128xf32>
    %cst_10 = arith.constant 0.000000e+00 : f32
    %79 = vector.broadcast %cst_10 : f32 to vector<8x128xf32>
    %80 = arith.maximumf %78, %79 : vector<8x128xf32>
    %c20 = arith.constant 20 : index
    %81 = memref.load %arg1[%c20] : memref<141xf32, #tpu.memory_space<smem>>
    %82 = vector.broadcast %81 : f32 to vector<8x128xf32>
    %83 = arith.mulf %82, %8 : vector<8x128xf32>
    %c21 = arith.constant 21 : index
    %84 = memref.load %arg1[%c21] : memref<141xf32, #tpu.memory_space<smem>>
    %85 = vector.broadcast %84 : f32 to vector<8x128xf32>
    %86 = arith.mulf %85, %16 : vector<8x128xf32>
    %c22 = arith.constant 22 : index
    %87 = memref.load %arg1[%c22] : memref<141xf32, #tpu.memory_space<smem>>
    %88 = vector.broadcast %87 : f32 to vector<8x128xf32>
    %89 = arith.mulf %88, %24 : vector<8x128xf32>
    %90 = arith.addf %83, %89 : vector<8x128xf32>
    %c23 = arith.constant 23 : index
    %91 = memref.load %arg1[%c23] : memref<141xf32, #tpu.memory_space<smem>>
    %92 = vector.broadcast %91 : f32 to vector<8x128xf32>
    %93 = arith.mulf %92, %32 : vector<8x128xf32>
    %94 = arith.addf %86, %93 : vector<8x128xf32>
    %c24 = arith.constant 24 : index
    %95 = memref.load %arg1[%c24] : memref<141xf32, #tpu.memory_space<smem>>
    %96 = vector.broadcast %95 : f32 to vector<8x128xf32>
    %97 = arith.mulf %96, %40 : vector<8x128xf32>
    %98 = arith.addf %90, %97 : vector<8x128xf32>
    %c25 = arith.constant 25 : index
    %99 = memref.load %arg1[%c25] : memref<141xf32, #tpu.memory_space<smem>>
    %100 = vector.broadcast %99 : f32 to vector<8x128xf32>
    %101 = arith.mulf %100, %48 : vector<8x128xf32>
    %102 = arith.addf %94, %101 : vector<8x128xf32>
    %c26 = arith.constant 26 : index
    %103 = memref.load %arg1[%c26] : memref<141xf32, #tpu.memory_space<smem>>
    %104 = vector.broadcast %103 : f32 to vector<8x128xf32>
    %105 = arith.mulf %104, %56 : vector<8x128xf32>
    %106 = arith.addf %98, %105 : vector<8x128xf32>
    %c27 = arith.constant 27 : index
    %107 = memref.load %arg1[%c27] : memref<141xf32, #tpu.memory_space<smem>>
    %108 = vector.broadcast %107 : f32 to vector<8x128xf32>
    %109 = arith.mulf %108, %64 : vector<8x128xf32>
    %110 = arith.addf %102, %109 : vector<8x128xf32>
    %c28 = arith.constant 28 : index
    %111 = memref.load %arg1[%c28] : memref<141xf32, #tpu.memory_space<smem>>
    %112 = vector.broadcast %111 : f32 to vector<8x128xf32>
    %113 = arith.mulf %112, %72 : vector<8x128xf32>
    %114 = arith.addf %106, %113 : vector<8x128xf32>
    %c29 = arith.constant 29 : index
    %115 = memref.load %arg1[%c29] : memref<141xf32, #tpu.memory_space<smem>>
    %116 = vector.broadcast %115 : f32 to vector<8x128xf32>
    %117 = arith.mulf %116, %80 : vector<8x128xf32>
    %118 = arith.addf %110, %117 : vector<8x128xf32>
    %119 = arith.addf %114, %118 : vector<8x128xf32>
    %c120 = arith.constant 120 : index
    %120 = memref.load %arg1[%c120] : memref<141xf32, #tpu.memory_space<smem>>
    %121 = vector.broadcast %120 : f32 to vector<8x128xf32>
    %122 = arith.addf %119, %121 : vector<8x128xf32>
    %cst_11 = arith.constant 0.000000e+00 : f32
    %123 = vector.broadcast %cst_11 : f32 to vector<8x128xf32>
    %124 = arith.maximumf %122, %123 : vector<8x128xf32>
    %c30 = arith.constant 30 : index
    %125 = memref.load %arg1[%c30] : memref<141xf32, #tpu.memory_space<smem>>
    %126 = vector.broadcast %125 : f32 to vector<8x128xf32>
    %127 = arith.mulf %126, %8 : vector<8x128xf32>
    %c31 = arith.constant 31 : index
    %128 = memref.load %arg1[%c31] : memref<141xf32, #tpu.memory_space<smem>>
    %129 = vector.broadcast %128 : f32 to vector<8x128xf32>
    %130 = arith.mulf %129, %16 : vector<8x128xf32>
    %c32 = arith.constant 32 : index
    %131 = memref.load %arg1[%c32] : memref<141xf32, #tpu.memory_space<smem>>
    %132 = vector.broadcast %131 : f32 to vector<8x128xf32>
    %133 = arith.mulf %132, %24 : vector<8x128xf32>
    %134 = arith.addf %127, %133 : vector<8x128xf32>
    %c33 = arith.constant 33 : index
    %135 = memref.load %arg1[%c33] : memref<141xf32, #tpu.memory_space<smem>>
    %136 = vector.broadcast %135 : f32 to vector<8x128xf32>
    %137 = arith.mulf %136, %32 : vector<8x128xf32>
    %138 = arith.addf %130, %137 : vector<8x128xf32>
    %c34 = arith.constant 34 : index
    %139 = memref.load %arg1[%c34] : memref<141xf32, #tpu.memory_space<smem>>
    %140 = vector.broadcast %139 : f32 to vector<8x128xf32>
    %141 = arith.mulf %140, %40 : vector<8x128xf32>
    %142 = arith.addf %134, %141 : vector<8x128xf32>
    %c35 = arith.constant 35 : index
    %143 = memref.load %arg1[%c35] : memref<141xf32, #tpu.memory_space<smem>>
    %144 = vector.broadcast %143 : f32 to vector<8x128xf32>
    %145 = arith.mulf %144, %48 : vector<8x128xf32>
    %146 = arith.addf %138, %145 : vector<8x128xf32>
    %c36 = arith.constant 36 : index
    %147 = memref.load %arg1[%c36] : memref<141xf32, #tpu.memory_space<smem>>
    %148 = vector.broadcast %147 : f32 to vector<8x128xf32>
    %149 = arith.mulf %148, %56 : vector<8x128xf32>
    %150 = arith.addf %142, %149 : vector<8x128xf32>
    %c37 = arith.constant 37 : index
    %151 = memref.load %arg1[%c37] : memref<141xf32, #tpu.memory_space<smem>>
    %152 = vector.broadcast %151 : f32 to vector<8x128xf32>
    %153 = arith.mulf %152, %64 : vector<8x128xf32>
    %154 = arith.addf %146, %153 : vector<8x128xf32>
    %c38 = arith.constant 38 : index
    %155 = memref.load %arg1[%c38] : memref<141xf32, #tpu.memory_space<smem>>
    %156 = vector.broadcast %155 : f32 to vector<8x128xf32>
    %157 = arith.mulf %156, %72 : vector<8x128xf32>
    %158 = arith.addf %150, %157 : vector<8x128xf32>
    %c39 = arith.constant 39 : index
    %159 = memref.load %arg1[%c39] : memref<141xf32, #tpu.memory_space<smem>>
    %160 = vector.broadcast %159 : f32 to vector<8x128xf32>
    %161 = arith.mulf %160, %80 : vector<8x128xf32>
    %162 = arith.addf %154, %161 : vector<8x128xf32>
    %163 = arith.addf %158, %162 : vector<8x128xf32>
    %c121 = arith.constant 121 : index
    %164 = memref.load %arg1[%c121] : memref<141xf32, #tpu.memory_space<smem>>
    %165 = vector.broadcast %164 : f32 to vector<8x128xf32>
    %166 = arith.addf %163, %165 : vector<8x128xf32>
    %cst_12 = arith.constant 0.000000e+00 : f32
    %167 = vector.broadcast %cst_12 : f32 to vector<8x128xf32>
    %168 = arith.maximumf %166, %167 : vector<8x128xf32>
    %c40 = arith.constant 40 : index
    %169 = memref.load %arg1[%c40] : memref<141xf32, #tpu.memory_space<smem>>
    %170 = vector.broadcast %169 : f32 to vector<8x128xf32>
    %171 = arith.mulf %170, %8 : vector<8x128xf32>
    %c41 = arith.constant 41 : index
    %172 = memref.load %arg1[%c41] : memref<141xf32, #tpu.memory_space<smem>>
    %173 = vector.broadcast %172 : f32 to vector<8x128xf32>
    %174 = arith.mulf %173, %16 : vector<8x128xf32>
    %c42 = arith.constant 42 : index
    %175 = memref.load %arg1[%c42] : memref<141xf32, #tpu.memory_space<smem>>
    %176 = vector.broadcast %175 : f32 to vector<8x128xf32>
    %177 = arith.mulf %176, %24 : vector<8x128xf32>
    %178 = arith.addf %171, %177 : vector<8x128xf32>
    %c43 = arith.constant 43 : index
    %179 = memref.load %arg1[%c43] : memref<141xf32, #tpu.memory_space<smem>>
    %180 = vector.broadcast %179 : f32 to vector<8x128xf32>
    %181 = arith.mulf %180, %32 : vector<8x128xf32>
    %182 = arith.addf %174, %181 : vector<8x128xf32>
    %c44 = arith.constant 44 : index
    %183 = memref.load %arg1[%c44] : memref<141xf32, #tpu.memory_space<smem>>
    %184 = vector.broadcast %183 : f32 to vector<8x128xf32>
    %185 = arith.mulf %184, %40 : vector<8x128xf32>
    %186 = arith.addf %178, %185 : vector<8x128xf32>
    %c45 = arith.constant 45 : index
    %187 = memref.load %arg1[%c45] : memref<141xf32, #tpu.memory_space<smem>>
    %188 = vector.broadcast %187 : f32 to vector<8x128xf32>
    %189 = arith.mulf %188, %48 : vector<8x128xf32>
    %190 = arith.addf %182, %189 : vector<8x128xf32>
    %c46 = arith.constant 46 : index
    %191 = memref.load %arg1[%c46] : memref<141xf32, #tpu.memory_space<smem>>
    %192 = vector.broadcast %191 : f32 to vector<8x128xf32>
    %193 = arith.mulf %192, %56 : vector<8x128xf32>
    %194 = arith.addf %186, %193 : vector<8x128xf32>
    %c47 = arith.constant 47 : index
    %195 = memref.load %arg1[%c47] : memref<141xf32, #tpu.memory_space<smem>>
    %196 = vector.broadcast %195 : f32 to vector<8x128xf32>
    %197 = arith.mulf %196, %64 : vector<8x128xf32>
    %198 = arith.addf %190, %197 : vector<8x128xf32>
    %c48 = arith.constant 48 : index
    %199 = memref.load %arg1[%c48] : memref<141xf32, #tpu.memory_space<smem>>
    %200 = vector.broadcast %199 : f32 to vector<8x128xf32>
    %201 = arith.mulf %200, %72 : vector<8x128xf32>
    %202 = arith.addf %194, %201 : vector<8x128xf32>
    %c49 = arith.constant 49 : index
    %203 = memref.load %arg1[%c49] : memref<141xf32, #tpu.memory_space<smem>>
    %204 = vector.broadcast %203 : f32 to vector<8x128xf32>
    %205 = arith.mulf %204, %80 : vector<8x128xf32>
    %206 = arith.addf %198, %205 : vector<8x128xf32>
    %207 = arith.addf %202, %206 : vector<8x128xf32>
    %c122 = arith.constant 122 : index
    %208 = memref.load %arg1[%c122] : memref<141xf32, #tpu.memory_space<smem>>
    %209 = vector.broadcast %208 : f32 to vector<8x128xf32>
    %210 = arith.addf %207, %209 : vector<8x128xf32>
    %cst_13 = arith.constant 0.000000e+00 : f32
    %211 = vector.broadcast %cst_13 : f32 to vector<8x128xf32>
    %212 = arith.maximumf %210, %211 : vector<8x128xf32>
    %c50 = arith.constant 50 : index
    %213 = memref.load %arg1[%c50] : memref<141xf32, #tpu.memory_space<smem>>
    %214 = vector.broadcast %213 : f32 to vector<8x128xf32>
    %215 = arith.mulf %214, %8 : vector<8x128xf32>
    %c51 = arith.constant 51 : index
    %216 = memref.load %arg1[%c51] : memref<141xf32, #tpu.memory_space<smem>>
    %217 = vector.broadcast %216 : f32 to vector<8x128xf32>
    %218 = arith.mulf %217, %16 : vector<8x128xf32>
    %c52 = arith.constant 52 : index
    %219 = memref.load %arg1[%c52] : memref<141xf32, #tpu.memory_space<smem>>
    %220 = vector.broadcast %219 : f32 to vector<8x128xf32>
    %221 = arith.mulf %220, %24 : vector<8x128xf32>
    %222 = arith.addf %215, %221 : vector<8x128xf32>
    %c53 = arith.constant 53 : index
    %223 = memref.load %arg1[%c53] : memref<141xf32, #tpu.memory_space<smem>>
    %224 = vector.broadcast %223 : f32 to vector<8x128xf32>
    %225 = arith.mulf %224, %32 : vector<8x128xf32>
    %226 = arith.addf %218, %225 : vector<8x128xf32>
    %c54 = arith.constant 54 : index
    %227 = memref.load %arg1[%c54] : memref<141xf32, #tpu.memory_space<smem>>
    %228 = vector.broadcast %227 : f32 to vector<8x128xf32>
    %229 = arith.mulf %228, %40 : vector<8x128xf32>
    %230 = arith.addf %222, %229 : vector<8x128xf32>
    %c55 = arith.constant 55 : index
    %231 = memref.load %arg1[%c55] : memref<141xf32, #tpu.memory_space<smem>>
    %232 = vector.broadcast %231 : f32 to vector<8x128xf32>
    %233 = arith.mulf %232, %48 : vector<8x128xf32>
    %234 = arith.addf %226, %233 : vector<8x128xf32>
    %c56 = arith.constant 56 : index
    %235 = memref.load %arg1[%c56] : memref<141xf32, #tpu.memory_space<smem>>
    %236 = vector.broadcast %235 : f32 to vector<8x128xf32>
    %237 = arith.mulf %236, %56 : vector<8x128xf32>
    %238 = arith.addf %230, %237 : vector<8x128xf32>
    %c57 = arith.constant 57 : index
    %239 = memref.load %arg1[%c57] : memref<141xf32, #tpu.memory_space<smem>>
    %240 = vector.broadcast %239 : f32 to vector<8x128xf32>
    %241 = arith.mulf %240, %64 : vector<8x128xf32>
    %242 = arith.addf %234, %241 : vector<8x128xf32>
    %c58 = arith.constant 58 : index
    %243 = memref.load %arg1[%c58] : memref<141xf32, #tpu.memory_space<smem>>
    %244 = vector.broadcast %243 : f32 to vector<8x128xf32>
    %245 = arith.mulf %244, %72 : vector<8x128xf32>
    %246 = arith.addf %238, %245 : vector<8x128xf32>
    %c59 = arith.constant 59 : index
    %247 = memref.load %arg1[%c59] : memref<141xf32, #tpu.memory_space<smem>>
    %248 = vector.broadcast %247 : f32 to vector<8x128xf32>
    %249 = arith.mulf %248, %80 : vector<8x128xf32>
    %250 = arith.addf %242, %249 : vector<8x128xf32>
    %251 = arith.addf %246, %250 : vector<8x128xf32>
    %c123 = arith.constant 123 : index
    %252 = memref.load %arg1[%c123] : memref<141xf32, #tpu.memory_space<smem>>
    %253 = vector.broadcast %252 : f32 to vector<8x128xf32>
    %254 = arith.addf %251, %253 : vector<8x128xf32>
    %cst_14 = arith.constant 0.000000e+00 : f32
    %255 = vector.broadcast %cst_14 : f32 to vector<8x128xf32>
    %256 = arith.maximumf %254, %255 : vector<8x128xf32>
    %c60 = arith.constant 60 : index
    %257 = memref.load %arg1[%c60] : memref<141xf32, #tpu.memory_space<smem>>
    %258 = vector.broadcast %257 : f32 to vector<8x128xf32>
    %259 = arith.mulf %258, %8 : vector<8x128xf32>
    %c61 = arith.constant 61 : index
    %260 = memref.load %arg1[%c61] : memref<141xf32, #tpu.memory_space<smem>>
    %261 = vector.broadcast %260 : f32 to vector<8x128xf32>
    %262 = arith.mulf %261, %16 : vector<8x128xf32>
    %c62 = arith.constant 62 : index
    %263 = memref.load %arg1[%c62] : memref<141xf32, #tpu.memory_space<smem>>
    %264 = vector.broadcast %263 : f32 to vector<8x128xf32>
    %265 = arith.mulf %264, %24 : vector<8x128xf32>
    %266 = arith.addf %259, %265 : vector<8x128xf32>
    %c63 = arith.constant 63 : index
    %267 = memref.load %arg1[%c63] : memref<141xf32, #tpu.memory_space<smem>>
    %268 = vector.broadcast %267 : f32 to vector<8x128xf32>
    %269 = arith.mulf %268, %32 : vector<8x128xf32>
    %270 = arith.addf %262, %269 : vector<8x128xf32>
    %c64 = arith.constant 64 : index
    %271 = memref.load %arg1[%c64] : memref<141xf32, #tpu.memory_space<smem>>
    %272 = vector.broadcast %271 : f32 to vector<8x128xf32>
    %273 = arith.mulf %272, %40 : vector<8x128xf32>
    %274 = arith.addf %266, %273 : vector<8x128xf32>
    %c65 = arith.constant 65 : index
    %275 = memref.load %arg1[%c65] : memref<141xf32, #tpu.memory_space<smem>>
    %276 = vector.broadcast %275 : f32 to vector<8x128xf32>
    %277 = arith.mulf %276, %48 : vector<8x128xf32>
    %278 = arith.addf %270, %277 : vector<8x128xf32>
    %c66 = arith.constant 66 : index
    %279 = memref.load %arg1[%c66] : memref<141xf32, #tpu.memory_space<smem>>
    %280 = vector.broadcast %279 : f32 to vector<8x128xf32>
    %281 = arith.mulf %280, %56 : vector<8x128xf32>
    %282 = arith.addf %274, %281 : vector<8x128xf32>
    %c67 = arith.constant 67 : index
    %283 = memref.load %arg1[%c67] : memref<141xf32, #tpu.memory_space<smem>>
    %284 = vector.broadcast %283 : f32 to vector<8x128xf32>
    %285 = arith.mulf %284, %64 : vector<8x128xf32>
    %286 = arith.addf %278, %285 : vector<8x128xf32>
    %c68 = arith.constant 68 : index
    %287 = memref.load %arg1[%c68] : memref<141xf32, #tpu.memory_space<smem>>
    %288 = vector.broadcast %287 : f32 to vector<8x128xf32>
    %289 = arith.mulf %288, %72 : vector<8x128xf32>
    %290 = arith.addf %282, %289 : vector<8x128xf32>
    %c69 = arith.constant 69 : index
    %291 = memref.load %arg1[%c69] : memref<141xf32, #tpu.memory_space<smem>>
    %292 = vector.broadcast %291 : f32 to vector<8x128xf32>
    %293 = arith.mulf %292, %80 : vector<8x128xf32>
    %294 = arith.addf %286, %293 : vector<8x128xf32>
    %295 = arith.addf %290, %294 : vector<8x128xf32>
    %c124 = arith.constant 124 : index
    %296 = memref.load %arg1[%c124] : memref<141xf32, #tpu.memory_space<smem>>
    %297 = vector.broadcast %296 : f32 to vector<8x128xf32>
    %298 = arith.addf %295, %297 : vector<8x128xf32>
    %cst_15 = arith.constant 0.000000e+00 : f32
    %299 = vector.broadcast %cst_15 : f32 to vector<8x128xf32>
    %300 = arith.maximumf %298, %299 : vector<8x128xf32>
    %c70 = arith.constant 70 : index
    %301 = memref.load %arg1[%c70] : memref<141xf32, #tpu.memory_space<smem>>
    %302 = vector.broadcast %301 : f32 to vector<8x128xf32>
    %303 = arith.mulf %302, %8 : vector<8x128xf32>
    %c71 = arith.constant 71 : index
    %304 = memref.load %arg1[%c71] : memref<141xf32, #tpu.memory_space<smem>>
    %305 = vector.broadcast %304 : f32 to vector<8x128xf32>
    %306 = arith.mulf %305, %16 : vector<8x128xf32>
    %c72 = arith.constant 72 : index
    %307 = memref.load %arg1[%c72] : memref<141xf32, #tpu.memory_space<smem>>
    %308 = vector.broadcast %307 : f32 to vector<8x128xf32>
    %309 = arith.mulf %308, %24 : vector<8x128xf32>
    %310 = arith.addf %303, %309 : vector<8x128xf32>
    %c73 = arith.constant 73 : index
    %311 = memref.load %arg1[%c73] : memref<141xf32, #tpu.memory_space<smem>>
    %312 = vector.broadcast %311 : f32 to vector<8x128xf32>
    %313 = arith.mulf %312, %32 : vector<8x128xf32>
    %314 = arith.addf %306, %313 : vector<8x128xf32>
    %c74 = arith.constant 74 : index
    %315 = memref.load %arg1[%c74] : memref<141xf32, #tpu.memory_space<smem>>
    %316 = vector.broadcast %315 : f32 to vector<8x128xf32>
    %317 = arith.mulf %316, %40 : vector<8x128xf32>
    %318 = arith.addf %310, %317 : vector<8x128xf32>
    %c75 = arith.constant 75 : index
    %319 = memref.load %arg1[%c75] : memref<141xf32, #tpu.memory_space<smem>>
    %320 = vector.broadcast %319 : f32 to vector<8x128xf32>
    %321 = arith.mulf %320, %48 : vector<8x128xf32>
    %322 = arith.addf %314, %321 : vector<8x128xf32>
    %c76 = arith.constant 76 : index
    %323 = memref.load %arg1[%c76] : memref<141xf32, #tpu.memory_space<smem>>
    %324 = vector.broadcast %323 : f32 to vector<8x128xf32>
    %325 = arith.mulf %324, %56 : vector<8x128xf32>
    %326 = arith.addf %318, %325 : vector<8x128xf32>
    %c77 = arith.constant 77 : index
    %327 = memref.load %arg1[%c77] : memref<141xf32, #tpu.memory_space<smem>>
    %328 = vector.broadcast %327 : f32 to vector<8x128xf32>
    %329 = arith.mulf %328, %64 : vector<8x128xf32>
    %330 = arith.addf %322, %329 : vector<8x128xf32>
    %c78 = arith.constant 78 : index
    %331 = memref.load %arg1[%c78] : memref<141xf32, #tpu.memory_space<smem>>
    %332 = vector.broadcast %331 : f32 to vector<8x128xf32>
    %333 = arith.mulf %332, %72 : vector<8x128xf32>
    %334 = arith.addf %326, %333 : vector<8x128xf32>
    %c79 = arith.constant 79 : index
    %335 = memref.load %arg1[%c79] : memref<141xf32, #tpu.memory_space<smem>>
    %336 = vector.broadcast %335 : f32 to vector<8x128xf32>
    %337 = arith.mulf %336, %80 : vector<8x128xf32>
    %338 = arith.addf %330, %337 : vector<8x128xf32>
    %339 = arith.addf %334, %338 : vector<8x128xf32>
    %c125 = arith.constant 125 : index
    %340 = memref.load %arg1[%c125] : memref<141xf32, #tpu.memory_space<smem>>
    %341 = vector.broadcast %340 : f32 to vector<8x128xf32>
    %342 = arith.addf %339, %341 : vector<8x128xf32>
    %cst_16 = arith.constant 0.000000e+00 : f32
    %343 = vector.broadcast %cst_16 : f32 to vector<8x128xf32>
    %344 = arith.maximumf %342, %343 : vector<8x128xf32>
    %c80 = arith.constant 80 : index
    %345 = memref.load %arg1[%c80] : memref<141xf32, #tpu.memory_space<smem>>
    %346 = vector.broadcast %345 : f32 to vector<8x128xf32>
    %347 = arith.mulf %346, %8 : vector<8x128xf32>
    %c81 = arith.constant 81 : index
    %348 = memref.load %arg1[%c81] : memref<141xf32, #tpu.memory_space<smem>>
    %349 = vector.broadcast %348 : f32 to vector<8x128xf32>
    %350 = arith.mulf %349, %16 : vector<8x128xf32>
    %c82 = arith.constant 82 : index
    %351 = memref.load %arg1[%c82] : memref<141xf32, #tpu.memory_space<smem>>
    %352 = vector.broadcast %351 : f32 to vector<8x128xf32>
    %353 = arith.mulf %352, %24 : vector<8x128xf32>
    %354 = arith.addf %347, %353 : vector<8x128xf32>
    %c83 = arith.constant 83 : index
    %355 = memref.load %arg1[%c83] : memref<141xf32, #tpu.memory_space<smem>>
    %356 = vector.broadcast %355 : f32 to vector<8x128xf32>
    %357 = arith.mulf %356, %32 : vector<8x128xf32>
    %358 = arith.addf %350, %357 : vector<8x128xf32>
    %c84 = arith.constant 84 : index
    %359 = memref.load %arg1[%c84] : memref<141xf32, #tpu.memory_space<smem>>
    %360 = vector.broadcast %359 : f32 to vector<8x128xf32>
    %361 = arith.mulf %360, %40 : vector<8x128xf32>
    %362 = arith.addf %354, %361 : vector<8x128xf32>
    %c85 = arith.constant 85 : index
    %363 = memref.load %arg1[%c85] : memref<141xf32, #tpu.memory_space<smem>>
    %364 = vector.broadcast %363 : f32 to vector<8x128xf32>
    %365 = arith.mulf %364, %48 : vector<8x128xf32>
    %366 = arith.addf %358, %365 : vector<8x128xf32>
    %c86 = arith.constant 86 : index
    %367 = memref.load %arg1[%c86] : memref<141xf32, #tpu.memory_space<smem>>
    %368 = vector.broadcast %367 : f32 to vector<8x128xf32>
    %369 = arith.mulf %368, %56 : vector<8x128xf32>
    %370 = arith.addf %362, %369 : vector<8x128xf32>
    %c87 = arith.constant 87 : index
    %371 = memref.load %arg1[%c87] : memref<141xf32, #tpu.memory_space<smem>>
    %372 = vector.broadcast %371 : f32 to vector<8x128xf32>
    %373 = arith.mulf %372, %64 : vector<8x128xf32>
    %374 = arith.addf %366, %373 : vector<8x128xf32>
    %c88 = arith.constant 88 : index
    %375 = memref.load %arg1[%c88] : memref<141xf32, #tpu.memory_space<smem>>
    %376 = vector.broadcast %375 : f32 to vector<8x128xf32>
    %377 = arith.mulf %376, %72 : vector<8x128xf32>
    %378 = arith.addf %370, %377 : vector<8x128xf32>
    %c89 = arith.constant 89 : index
    %379 = memref.load %arg1[%c89] : memref<141xf32, #tpu.memory_space<smem>>
    %380 = vector.broadcast %379 : f32 to vector<8x128xf32>
    %381 = arith.mulf %380, %80 : vector<8x128xf32>
    %382 = arith.addf %374, %381 : vector<8x128xf32>
    %383 = arith.addf %378, %382 : vector<8x128xf32>
    %c126 = arith.constant 126 : index
    %384 = memref.load %arg1[%c126] : memref<141xf32, #tpu.memory_space<smem>>
    %385 = vector.broadcast %384 : f32 to vector<8x128xf32>
    %386 = arith.addf %383, %385 : vector<8x128xf32>
    %cst_17 = arith.constant 0.000000e+00 : f32
    %387 = vector.broadcast %cst_17 : f32 to vector<8x128xf32>
    %388 = arith.maximumf %386, %387 : vector<8x128xf32>
    %c90 = arith.constant 90 : index
    %389 = memref.load %arg1[%c90] : memref<141xf32, #tpu.memory_space<smem>>
    %390 = vector.broadcast %389 : f32 to vector<8x128xf32>
    %391 = arith.mulf %390, %8 : vector<8x128xf32>
    %c91 = arith.constant 91 : index
    %392 = memref.load %arg1[%c91] : memref<141xf32, #tpu.memory_space<smem>>
    %393 = vector.broadcast %392 : f32 to vector<8x128xf32>
    %394 = arith.mulf %393, %16 : vector<8x128xf32>
    %c92 = arith.constant 92 : index
    %395 = memref.load %arg1[%c92] : memref<141xf32, #tpu.memory_space<smem>>
    %396 = vector.broadcast %395 : f32 to vector<8x128xf32>
    %397 = arith.mulf %396, %24 : vector<8x128xf32>
    %398 = arith.addf %391, %397 : vector<8x128xf32>
    %c93 = arith.constant 93 : index
    %399 = memref.load %arg1[%c93] : memref<141xf32, #tpu.memory_space<smem>>
    %400 = vector.broadcast %399 : f32 to vector<8x128xf32>
    %401 = arith.mulf %400, %32 : vector<8x128xf32>
    %402 = arith.addf %394, %401 : vector<8x128xf32>
    %c94 = arith.constant 94 : index
    %403 = memref.load %arg1[%c94] : memref<141xf32, #tpu.memory_space<smem>>
    %404 = vector.broadcast %403 : f32 to vector<8x128xf32>
    %405 = arith.mulf %404, %40 : vector<8x128xf32>
    %406 = arith.addf %398, %405 : vector<8x128xf32>
    %c95 = arith.constant 95 : index
    %407 = memref.load %arg1[%c95] : memref<141xf32, #tpu.memory_space<smem>>
    %408 = vector.broadcast %407 : f32 to vector<8x128xf32>
    %409 = arith.mulf %408, %48 : vector<8x128xf32>
    %410 = arith.addf %402, %409 : vector<8x128xf32>
    %c96 = arith.constant 96 : index
    %411 = memref.load %arg1[%c96] : memref<141xf32, #tpu.memory_space<smem>>
    %412 = vector.broadcast %411 : f32 to vector<8x128xf32>
    %413 = arith.mulf %412, %56 : vector<8x128xf32>
    %414 = arith.addf %406, %413 : vector<8x128xf32>
    %c97 = arith.constant 97 : index
    %415 = memref.load %arg1[%c97] : memref<141xf32, #tpu.memory_space<smem>>
    %416 = vector.broadcast %415 : f32 to vector<8x128xf32>
    %417 = arith.mulf %416, %64 : vector<8x128xf32>
    %418 = arith.addf %410, %417 : vector<8x128xf32>
    %c98 = arith.constant 98 : index
    %419 = memref.load %arg1[%c98] : memref<141xf32, #tpu.memory_space<smem>>
    %420 = vector.broadcast %419 : f32 to vector<8x128xf32>
    %421 = arith.mulf %420, %72 : vector<8x128xf32>
    %422 = arith.addf %414, %421 : vector<8x128xf32>
    %c99 = arith.constant 99 : index
    %423 = memref.load %arg1[%c99] : memref<141xf32, #tpu.memory_space<smem>>
    %424 = vector.broadcast %423 : f32 to vector<8x128xf32>
    %425 = arith.mulf %424, %80 : vector<8x128xf32>
    %426 = arith.addf %418, %425 : vector<8x128xf32>
    %427 = arith.addf %422, %426 : vector<8x128xf32>
    %c127 = arith.constant 127 : index
    %428 = memref.load %arg1[%c127] : memref<141xf32, #tpu.memory_space<smem>>
    %429 = vector.broadcast %428 : f32 to vector<8x128xf32>
    %430 = arith.addf %427, %429 : vector<8x128xf32>
    %cst_18 = arith.constant 0.000000e+00 : f32
    %431 = vector.broadcast %cst_18 : f32 to vector<8x128xf32>
    %432 = arith.maximumf %430, %431 : vector<8x128xf32>
    %c100 = arith.constant 100 : index
    %433 = memref.load %arg1[%c100] : memref<141xf32, #tpu.memory_space<smem>>
    %434 = vector.broadcast %433 : f32 to vector<8x128xf32>
    %435 = arith.mulf %434, %8 : vector<8x128xf32>
    %c101 = arith.constant 101 : index
    %436 = memref.load %arg1[%c101] : memref<141xf32, #tpu.memory_space<smem>>
    %437 = vector.broadcast %436 : f32 to vector<8x128xf32>
    %438 = arith.mulf %437, %16 : vector<8x128xf32>
    %c102 = arith.constant 102 : index
    %439 = memref.load %arg1[%c102] : memref<141xf32, #tpu.memory_space<smem>>
    %440 = vector.broadcast %439 : f32 to vector<8x128xf32>
    %441 = arith.mulf %440, %24 : vector<8x128xf32>
    %442 = arith.addf %435, %441 : vector<8x128xf32>
    %c103 = arith.constant 103 : index
    %443 = memref.load %arg1[%c103] : memref<141xf32, #tpu.memory_space<smem>>
    %444 = vector.broadcast %443 : f32 to vector<8x128xf32>
    %445 = arith.mulf %444, %32 : vector<8x128xf32>
    %446 = arith.addf %438, %445 : vector<8x128xf32>
    %c104 = arith.constant 104 : index
    %447 = memref.load %arg1[%c104] : memref<141xf32, #tpu.memory_space<smem>>
    %448 = vector.broadcast %447 : f32 to vector<8x128xf32>
    %449 = arith.mulf %448, %40 : vector<8x128xf32>
    %450 = arith.addf %442, %449 : vector<8x128xf32>
    %c105 = arith.constant 105 : index
    %451 = memref.load %arg1[%c105] : memref<141xf32, #tpu.memory_space<smem>>
    %452 = vector.broadcast %451 : f32 to vector<8x128xf32>
    %453 = arith.mulf %452, %48 : vector<8x128xf32>
    %454 = arith.addf %446, %453 : vector<8x128xf32>
    %c106 = arith.constant 106 : index
    %455 = memref.load %arg1[%c106] : memref<141xf32, #tpu.memory_space<smem>>
    %456 = vector.broadcast %455 : f32 to vector<8x128xf32>
    %457 = arith.mulf %456, %56 : vector<8x128xf32>
    %458 = arith.addf %450, %457 : vector<8x128xf32>
    %c107 = arith.constant 107 : index
    %459 = memref.load %arg1[%c107] : memref<141xf32, #tpu.memory_space<smem>>
    %460 = vector.broadcast %459 : f32 to vector<8x128xf32>
    %461 = arith.mulf %460, %64 : vector<8x128xf32>
    %462 = arith.addf %454, %461 : vector<8x128xf32>
    %c108 = arith.constant 108 : index
    %463 = memref.load %arg1[%c108] : memref<141xf32, #tpu.memory_space<smem>>
    %464 = vector.broadcast %463 : f32 to vector<8x128xf32>
    %465 = arith.mulf %464, %72 : vector<8x128xf32>
    %466 = arith.addf %458, %465 : vector<8x128xf32>
    %c109 = arith.constant 109 : index
    %467 = memref.load %arg1[%c109] : memref<141xf32, #tpu.memory_space<smem>>
    %468 = vector.broadcast %467 : f32 to vector<8x128xf32>
    %469 = arith.mulf %468, %80 : vector<8x128xf32>
    %470 = arith.addf %462, %469 : vector<8x128xf32>
    %471 = arith.addf %466, %470 : vector<8x128xf32>
    %c128 = arith.constant 128 : index
    %472 = memref.load %arg1[%c128] : memref<141xf32, #tpu.memory_space<smem>>
    %473 = vector.broadcast %472 : f32 to vector<8x128xf32>
    %474 = arith.addf %471, %473 : vector<8x128xf32>
    %cst_19 = arith.constant 0.000000e+00 : f32
    %475 = vector.broadcast %cst_19 : f32 to vector<8x128xf32>
    %476 = arith.maximumf %474, %475 : vector<8x128xf32>
    %c110 = arith.constant 110 : index
    %477 = memref.load %arg1[%c110] : memref<141xf32, #tpu.memory_space<smem>>
    %478 = vector.broadcast %477 : f32 to vector<8x128xf32>
    %479 = arith.mulf %478, %8 : vector<8x128xf32>
    %c111 = arith.constant 111 : index
    %480 = memref.load %arg1[%c111] : memref<141xf32, #tpu.memory_space<smem>>
    %481 = vector.broadcast %480 : f32 to vector<8x128xf32>
    %482 = arith.mulf %481, %16 : vector<8x128xf32>
    %c112 = arith.constant 112 : index
    %483 = memref.load %arg1[%c112] : memref<141xf32, #tpu.memory_space<smem>>
    %484 = vector.broadcast %483 : f32 to vector<8x128xf32>
    %485 = arith.mulf %484, %24 : vector<8x128xf32>
    %486 = arith.addf %479, %485 : vector<8x128xf32>
    %c113 = arith.constant 113 : index
    %487 = memref.load %arg1[%c113] : memref<141xf32, #tpu.memory_space<smem>>
    %488 = vector.broadcast %487 : f32 to vector<8x128xf32>
    %489 = arith.mulf %488, %32 : vector<8x128xf32>
    %490 = arith.addf %482, %489 : vector<8x128xf32>
    %c114 = arith.constant 114 : index
    %491 = memref.load %arg1[%c114] : memref<141xf32, #tpu.memory_space<smem>>
    %492 = vector.broadcast %491 : f32 to vector<8x128xf32>
    %493 = arith.mulf %492, %40 : vector<8x128xf32>
    %494 = arith.addf %486, %493 : vector<8x128xf32>
    %c115 = arith.constant 115 : index
    %495 = memref.load %arg1[%c115] : memref<141xf32, #tpu.memory_space<smem>>
    %496 = vector.broadcast %495 : f32 to vector<8x128xf32>
    %497 = arith.mulf %496, %48 : vector<8x128xf32>
    %498 = arith.addf %490, %497 : vector<8x128xf32>
    %c116 = arith.constant 116 : index
    %499 = memref.load %arg1[%c116] : memref<141xf32, #tpu.memory_space<smem>>
    %500 = vector.broadcast %499 : f32 to vector<8x128xf32>
    %501 = arith.mulf %500, %56 : vector<8x128xf32>
    %502 = arith.addf %494, %501 : vector<8x128xf32>
    %c117 = arith.constant 117 : index
    %503 = memref.load %arg1[%c117] : memref<141xf32, #tpu.memory_space<smem>>
    %504 = vector.broadcast %503 : f32 to vector<8x128xf32>
    %505 = arith.mulf %504, %64 : vector<8x128xf32>
    %506 = arith.addf %498, %505 : vector<8x128xf32>
    %c118 = arith.constant 118 : index
    %507 = memref.load %arg1[%c118] : memref<141xf32, #tpu.memory_space<smem>>
    %508 = vector.broadcast %507 : f32 to vector<8x128xf32>
    %509 = arith.mulf %508, %72 : vector<8x128xf32>
    %510 = arith.addf %502, %509 : vector<8x128xf32>
    %c119 = arith.constant 119 : index
    %511 = memref.load %arg1[%c119] : memref<141xf32, #tpu.memory_space<smem>>
    %512 = vector.broadcast %511 : f32 to vector<8x128xf32>
    %513 = arith.mulf %512, %80 : vector<8x128xf32>
    %514 = arith.addf %506, %513 : vector<8x128xf32>
    %515 = arith.addf %510, %514 : vector<8x128xf32>
    %c129 = arith.constant 129 : index
    %516 = memref.load %arg1[%c129] : memref<141xf32, #tpu.memory_space<smem>>
    %517 = vector.broadcast %516 : f32 to vector<8x128xf32>
    %518 = arith.addf %515, %517 : vector<8x128xf32>
    %cst_20 = arith.constant 0.000000e+00 : f32
    %519 = vector.broadcast %cst_20 : f32 to vector<8x128xf32>
    %520 = arith.maximumf %518, %519 : vector<8x128xf32>
    %c130 = arith.constant 130 : index
    %521 = memref.load %arg1[%c130] : memref<141xf32, #tpu.memory_space<smem>>
    %522 = vector.broadcast %521 : f32 to vector<8x128xf32>
    %523 = arith.mulf %522, %124 : vector<8x128xf32>
    %c131 = arith.constant 131 : index
    %524 = memref.load %arg1[%c131] : memref<141xf32, #tpu.memory_space<smem>>
    %525 = vector.broadcast %524 : f32 to vector<8x128xf32>
    %526 = arith.mulf %525, %168 : vector<8x128xf32>
    %c132 = arith.constant 132 : index
    %527 = memref.load %arg1[%c132] : memref<141xf32, #tpu.memory_space<smem>>
    %528 = vector.broadcast %527 : f32 to vector<8x128xf32>
    %529 = arith.mulf %528, %212 : vector<8x128xf32>
    %530 = arith.addf %523, %529 : vector<8x128xf32>
    %c133 = arith.constant 133 : index
    %531 = memref.load %arg1[%c133] : memref<141xf32, #tpu.memory_space<smem>>
    %532 = vector.broadcast %531 : f32 to vector<8x128xf32>
    %533 = arith.mulf %532, %256 : vector<8x128xf32>
    %534 = arith.addf %526, %533 : vector<8x128xf32>
    %c134 = arith.constant 134 : index
    %535 = memref.load %arg1[%c134] : memref<141xf32, #tpu.memory_space<smem>>
    %536 = vector.broadcast %535 : f32 to vector<8x128xf32>
    %537 = arith.mulf %536, %300 : vector<8x128xf32>
    %538 = arith.addf %530, %537 : vector<8x128xf32>
    %c135 = arith.constant 135 : index
    %539 = memref.load %arg1[%c135] : memref<141xf32, #tpu.memory_space<smem>>
    %540 = vector.broadcast %539 : f32 to vector<8x128xf32>
    %541 = arith.mulf %540, %344 : vector<8x128xf32>
    %542 = arith.addf %534, %541 : vector<8x128xf32>
    %c136 = arith.constant 136 : index
    %543 = memref.load %arg1[%c136] : memref<141xf32, #tpu.memory_space<smem>>
    %544 = vector.broadcast %543 : f32 to vector<8x128xf32>
    %545 = arith.mulf %544, %388 : vector<8x128xf32>
    %546 = arith.addf %538, %545 : vector<8x128xf32>
    %c137 = arith.constant 137 : index
    %547 = memref.load %arg1[%c137] : memref<141xf32, #tpu.memory_space<smem>>
    %548 = vector.broadcast %547 : f32 to vector<8x128xf32>
    %549 = arith.mulf %548, %432 : vector<8x128xf32>
    %550 = arith.addf %542, %549 : vector<8x128xf32>
    %c138 = arith.constant 138 : index
    %551 = memref.load %arg1[%c138] : memref<141xf32, #tpu.memory_space<smem>>
    %552 = vector.broadcast %551 : f32 to vector<8x128xf32>
    %553 = arith.mulf %552, %476 : vector<8x128xf32>
    %554 = arith.addf %546, %553 : vector<8x128xf32>
    %c139 = arith.constant 139 : index
    %555 = memref.load %arg1[%c139] : memref<141xf32, #tpu.memory_space<smem>>
    %556 = vector.broadcast %555 : f32 to vector<8x128xf32>
    %557 = arith.mulf %556, %520 : vector<8x128xf32>
    %558 = arith.addf %550, %557 : vector<8x128xf32>
    %559 = arith.addf %554, %558 : vector<8x128xf32>
    %c140 = arith.constant 140 : index
    %560 = memref.load %arg1[%c140] : memref<141xf32, #tpu.memory_space<smem>>
    %561 = vector.broadcast %560 : f32 to vector<8x128xf32>
    %562 = arith.addf %559, %561 : vector<8x128xf32>
    %c0_21 = arith.constant 0 : index
    %c0_22 = arith.constant 0 : index
    %563 = vector.load %arg3[%c0_21, %c0_22] : memref<8x128xf32, #tpu.memory_space<vmem>>, vector<8x128xf32>
    tpu.vector_store %arg3[%c0_21, %c0_22], %562 {strides = array<i32>} : memref<8x128xf32, #tpu.memory_space<vmem>>, vector<8x128xf32>,
    return
  }
  func.func @transform_0(%arg0: i32, %arg1: memref<141xf32, #tpu.memory_space<smem>>) -> (i32, i32) {
    %c0_i32 = arith.constant 0 : i32
    %c0_i32_0 = arith.constant 0 : i32
    return %arg0, %c0_i32 : i32, i32
  }
  func.func @transform_1(%arg0: i32, %arg1: memref<141xf32, #tpu.memory_space<smem>>) -> (i32, i32) {
    %c0_i32 = arith.constant 0 : i32
    %c0_i32_0 = arith.constant 0 : i32
    return %arg0, %c0_i32 : i32, i32
  }
}

</mosaic_0001>

<llo_original>
// kernel: tpu_custom_call.1
$region0: #{tpu_custom_call.1}
  #allocation0 [shape = 'u32[]', space=smem, size = 0x4, offset = 0x4, fixed_abs, tag = 'smem constant byte address 0x4 - core index']
  #allocation1 [shape = 'u32[144,128]{1,0:T(1,128)}', space=vmem, size = 0x12000, scoped, tag = 'internal scratch']
  #allocation2 [shape = 's32[1]{0}', space=sflag, size = 0x4, scoped, tag = 'scoped memory for tpu_custom_call.1']
  #allocation3 [shape = 'u8[1024]{0}', space=smem, size = 0x400, scoped, tag = 'prefetched SMEM operand 0']
  %s0 = inlined_call_operand.hbm [shape: f32[141], index: 0, kind: input, shape index: {}]
  %s1 = inlined_call_operand.hbm [shape: f32[8,128], index: 1, kind: input, shape index: {}]
  %s2 = inlined_call_operand.hbm [shape: f32[8,128], index: 2, kind: output, shape index: {}]
  %s3 = sld [smem:[#allocation0]]
  $region18: #{tpu_custom_call.1} parent=0
    _
  %s5 = ssub.s32 1, %s3
  %s6 = scalar_select 0, %s5, %s3
  %8 = dma.hbm_to_smem %s0, 32, [#allocation3], [#allocation2]
  %9 = dma.done [#allocation2], 32
  %10 = sfence
  $region1: #{tpu_custom_call.1} parent=0
    #allocation4 [shape = 'u8[4096]{0}', space=vmem, size = 0x1000, scoped, tag = 'input window, operand 1, single buffered']
    #allocation5 [shape = 's32[1]{0}', space=sflag, size = 0x4, scoped, tag = 'scoped memory for tpu_custom_call.1']
    #allocation6 [shape = 's32[1]{0}', space=sflag, size = 0x4, scoped, tag = 'scoped memory for tpu_custom_call.1']
    #allocation7 [shape = 'u8[4096]{0}', space=vmem, size = 0x1000, scoped, tag = 'output window, operand 0, single buffered']
    %11 = vsyncpa [#allocation5], 0
    %12 = vsyncpa [#allocation6], 0
    // Predicated region
    $region2: #{tpu_custom_call.1} parent=1 // pred_check
      _
    $region3: #{tpu_custom_call.1} parent=1 // pred_check_branch
      %14 = sbr.rel (0) target = $region5
    $region4: #{tpu_custom_call.1} parent=1 // pred_region
      %s16 = ssub.s32 128, 128
      %17 = vsyncadd [#allocation5], %s16
      %s19 = sshll.u32 [#allocation4], 4
      %s20 = int_to_ptr.vmem [resolvable:$true] %s19
      %22 = dma.hbm_to_vmem [thread:$0]  %s1, 128, %s20, [#allocation5]
    $region5: #{tpu_custom_call.1} parent=1 // pred_fallthru
      _
    // Predicated region
    $region6: #{tpu_custom_call.1} parent=1 // pred_check
      _
    $region7: #{tpu_custom_call.1} parent=1 // pred_check_branch
      %24 = sbr.rel (0) target = $region9
    $region8: #{tpu_custom_call.1} parent=1 // pred_region
      %25 = dma.done [#allocation5], 128
    $region9: #{tpu_custom_call.1} parent=1 // pred_fallthru
      _
    %v26 = vld [vmem:[#allocation4] sm:$0xff]
    %s27 = sld [smem:[#allocation3]]
    %v28 = vstv %s27
    %v29 = vmul.f32 %v28, %v26
    %s30 = sld [smem:[#allocation3 + $0xa]]
    %v31 = vstv %s30
    %v32 = vadd.f32 %v29, %v31
    %v33 = vmax.f32 %v32, 0.0
    %s34 = sld [smem:[#allocation3 + $0x1]]
    %v35 = vstv %s34
    %v36 = vmul.f32 %v35, %v26
    %s37 = sld [smem:[#allocation3 + $0xb]]
    %v38 = vstv %s37
    %v39 = vadd.f32 %v36, %v38
    %v40 = vmax.f32 %v39, 0.0
    %s41 = sld [smem:[#allocation3 + $0x2]]
    %v42 = vstv %s41
    %v43 = vmul.f32 %v42, %v26
    %s44 = sld [smem:[#allocation3 + $0xc]]
    %v45 = vstv %s44
    %v46 = vadd.f32 %v43, %v45
    %v47 = vmax.f32 %v46, 0.0
    %s48 = sld [smem:[#allocation3 + $0x3]]
    %v49 = vstv %s48
    %v50 = vmul.f32 %v49, %v26
    %s51 = sld [smem:[#allocation3 + $0xd]]
    %v52 = vstv %s51
    %v53 = vadd.f32 %v50, %v52
    %v54 = vmax.f32 %v53, 0.0
    %s55 = sld [smem:[#allocation3 + $0x4]]
    %v56 = vstv %s55
    %v57 = vmul.f32 %v56, %v26
    %s58 = sld [smem:[#allocation3 + $0xe]]
    %v59 = vstv %s58
    %v60 = vadd.f32 %v57, %v59
    %v61 = vmax.f32 %v60, 0.0
    %s62 = sld [smem:[#allocation3 + $0x5]]
    %v63 = vstv %s62
    %v64 = vmul.f32 %v63, %v26
    %s65 = sld [smem:[#allocation3 + $0xf]]
    %v66 = vstv %s65
    %v67 = vadd.f32 %v64, %v66
    %v68 = vmax.f32 %v67, 0.0
    %s69 = sld [smem:[#allocation3 + $0x6]]
    %v70 = vstv %s69
    %v71 = vmul.f32 %v70, %v26
    %s72 = sld [smem:[#allocation3 + $0x10]]
    %v73 = vstv %s72
    %v74 = vadd.f32 %v71, %v73
    %v75 = vmax.f32 %v74, 0.0
    %s76 = sld [smem:[#allocation3 + $0x7]]
    %v77 = vstv %s76
    %v78 = vmul.f32 %v77, %v26
    %s79 = sld [smem:[#allocation3 + $0x11]]
    %v80 = vstv %s79
    %v81 = vadd.f32 %v78, %v80
    %v82 = vmax.f32 %v81, 0.0
    %s83 = sld [smem:[#allocation3 + $0x8]]
    %v84 = vstv %s83
    %v85 = vmul.f32 %v84, %v26
    %s86 = sld [smem:[#allocation3 + $0x12]]
    %v87 = vstv %s86
    %v88 = vadd.f32 %v85, %v87
    %v89 = vmax.f32 %v88, 0.0
    %s90 = sld [smem:[#allocation3 + $0x9]]
    %v91 = vstv %s90
    %v92 = vmul.f32 %v91, %v26
    %s93 = sld [smem:[#allocation3 + $0x13]]
    %v94 = vstv %s93
    %v95 = vadd.f32 %v92, %v94
    %v96 = vmax.f32 %v95, 0.0
    %s97 = sld [smem:[#allocation3 + $0x14]]
    %v98 = vstv %s97
    %v99 = vmul.f32 %v98, %v33
    %s100 = sld [smem:[#allocation3 + $0x15]]
    %v101 = vstv %s100
    %v102 = vmul.f32 %v101, %v40
    %s103 = sld [smem:[#allocation3 + $0x16]]
    %v104 = vstv %s103
    %v105 = vmul.f32 %v104, %v47
    %v106 = vadd.f32 %v99, %v105
    %s107 = sld [smem:[#allocation3 + $0x17]]
    %v108 = vstv %s107
    %v109 = vmul.f32 %v108, %v54
    %v110 = vadd.f32 %v102, %v109
    %s111 = sld [smem:[#allocation3 + $0x18]]
    %v112 = vstv %s111
    %v113 = vmul.f32 %v112, %v61
    %v114 = vadd.f32 %v106, %v113
    %s115 = sld [smem:[#allocation3 + $0x19]]
    %v116 = vstv %s115
    %v117 = vmul.f32 %v116, %v68
    %v118 = vadd.f32 %v110, %v117
    %s119 = sld [smem:[#allocation3 + $0x1a]]
    %v120 = vstv %s119
    %v121 = vmul.f32 %v120, %v75
    %v122 = vadd.f32 %v114, %v121
    %s123 = sld [smem:[#allocation3 + $0x1b]]
    %v124 = vstv %s123
    %v125 = vmul.f32 %v124, %v82
    %v126 = vadd.f32 %v118, %v125
    %s127 = sld [smem:[#allocation3 + $0x1c]]
    %v128 = vstv %s127
    %v129 = vmul.f32 %v128, %v89
    %v130 = vadd.f32 %v122, %v129
    %s131 = sld [smem:[#allocation3 + $0x1d]]
    %v132 = vstv %s131
    %v133 = vmul.f32 %v132, %v96
    %v134 = vadd.f32 %v126, %v133
    %v135 = vadd.f32 %v130, %v134
    %s136 = sld [smem:[#allocation3 + $0x78]]
    %v137 = vstv %s136
    %v138 = vadd.f32 %v135, %v137
    %v139 = vmax.f32 %v138, 0.0
    %s140 = sld [smem:[#allocation3 + $0x1e]]
    %v141 = vstv %s140
    %v142 = vmul.f32 %v141, %v33
    %s143 = sld [smem:[#allocation3 + $0x1f]]
    %v144 = vstv %s143
    %v145 = vmul.f32 %v144, %v40
    %s146 = sld [smem:[#allocation3 + $0x20]]
    %v147 = vstv %s146
    %v148 = vmul.f32 %v147, %v47
    %v149 = vadd.f32 %v142, %v148
    %s150 = sld [smem:[#allocation3 + $0x21]]
    %v151 = vstv %s150
    %v152 = vmul.f32 %v151, %v54
    %v153 = vadd.f32 %v145, %v152
    %s154 = sld [smem:[#allocation3 + $0x22]]
    %v155 = vstv %s154
    %v156 = vmul.f32 %v155, %v61
    %v157 = vadd.f32 %v149, %v156
    %s158 = sld [smem:[#allocation3 + $0x23]]
    %v159 = vstv %s158
    %v160 = vmul.f32 %v159, %v68
    %v161 = vadd.f32 %v153, %v160
    %s162 = sld [smem:[#allocation3 + $0x24]]
    %v163 = vstv %s162
    %v164 = vmul.f32 %v163, %v75
    %v165 = vadd.f32 %v157, %v164
    %s166 = sld [smem:[#allocation3 + $0x25]]
    %v167 = vstv %s166
    %v168 = vmul.f32 %v167, %v82
    %v169 = vadd.f32 %v161, %v168
    %s170 = sld [smem:[#allocation3 + $0x26]]
    %v171 = vstv %s170
    %v172 = vmul.f32 %v171, %v89
    %v173 = vadd.f32 %v165, %v172
    %s174 = sld [smem:[#allocation3 + $0x27]]
    %v175 = vstv %s174
    %v176 = vmul.f32 %v175, %v96
    %v177 = vadd.f32 %v169, %v176
    %v178 = vadd.f32 %v173, %v177
    %s179 = sld [smem:[#allocation3 + $0x79]]
    %v180 = vstv %s179
    %v181 = vadd.f32 %v178, %v180
    %v182 = vmax.f32 %v181, 0.0
    %s183 = sld [smem:[#allocation3 + $0x28]]
    %v184 = vstv %s183
    %v185 = vmul.f32 %v184, %v33
    %s186 = sld [smem:[#allocation3 + $0x29]]
    %v187 = vstv %s186
    %v188 = vmul.f32 %v187, %v40
    %s189 = sld [smem:[#allocation3 + $0x2a]]
    %v190 = vstv %s189
    %v191 = vmul.f32 %v190, %v47
    %v192 = vadd.f32 %v185, %v191
    %s193 = sld [smem:[#allocation3 + $0x2b]]
    %v194 = vstv %s193
    %v195 = vmul.f32 %v194, %v54
    %v196 = vadd.f32 %v188, %v195
    %s197 = sld [smem:[#allocation3 + $0x2c]]
    %v198 = vstv %s197
    %v199 = vmul.f32 %v198, %v61
    %v200 = vadd.f32 %v192, %v199
    %s201 = sld [smem:[#allocation3 + $0x2d]]
    %v202 = vstv %s201
    %v203 = vmul.f32 %v202, %v68
    %v204 = vadd.f32 %v196, %v203
    %s205 = sld [smem:[#allocation3 + $0x2e]]
    %v206 = vstv %s205
    %v207 = vmul.f32 %v206, %v75
    %v208 = vadd.f32 %v200, %v207
    %s209 = sld [smem:[#allocation3 + $0x2f]]
    %v210 = vstv %s209
    %v211 = vmul.f32 %v210, %v82
    %v212 = vadd.f32 %v204, %v211
    %s213 = sld [smem:[#allocation3 + $0x30]]
    %v214 = vstv %s213
    %v215 = vmul.f32 %v214, %v89
    %v216 = vadd.f32 %v208, %v215
    %s217 = sld [smem:[#allocation3 + $0x31]]
    %v218 = vstv %s217
    %v219 = vmul.f32 %v218, %v96
    %v220 = vadd.f32 %v212, %v219
    %v221 = vadd.f32 %v216, %v220
    %s222 = sld [smem:[#allocation3 + $0x7a]]
    %v223 = vstv %s222
    %v224 = vadd.f32 %v221, %v223
    %v225 = vmax.f32 %v224, 0.0
    %s226 = sld [smem:[#allocation3 + $0x32]]
    %v227 = vstv %s226
    %v228 = vmul.f32 %v227, %v33
    %s229 = sld [smem:[#allocation3 + $0x33]]
    %v230 = vstv %s229
    %v231 = vmul.f32 %v230, %v40
    %s232 = sld [smem:[#allocation3 + $0x34]]
    %v233 = vstv %s232
    %v234 = vmul.f32 %v233, %v47
    %v235 = vadd.f32 %v228, %v234
    %s236 = sld [smem:[#allocation3 + $0x35]]
    %v237 = vstv %s236
    %v238 = vmul.f32 %v237, %v54
    %v239 = vadd.f32 %v231, %v238
    %s240 = sld [smem:[#allocation3 + $0x36]]
    %v241 = vstv %s240
    %v242 = vmul.f32 %v241, %v61
    %v243 = vadd.f32 %v235, %v242
    %s244 = sld [smem:[#allocation3 + $0x37]]
    %v245 = vstv %s244
    %v246 = vmul.f32 %v245, %v68
    %v247 = vadd.f32 %v239, %v246
    %s248 = sld [smem:[#allocation3 + $0x38]]
    %v249 = vstv %s248
    %v250 = vmul.f32 %v249, %v75
    %v251 = vadd.f32 %v243, %v250
    %s252 = sld [smem:[#allocation3 + $0x39]]
    %v253 = vstv %s252
    %v254 = vmul.f32 %v253, %v82
    %v255 = vadd.f32 %v247, %v254
    %s256 = sld [smem:[#allocation3 + $0x3a]]
    %v257 = vstv %s256
    %v258 = vmul.f32 %v257, %v89
    %v259 = vadd.f32 %v251, %v258
    %s260 = sld [smem:[#allocation3 + $0x3b]]
    %v261 = vstv %s260
    %v262 = vmul.f32 %v261, %v96
    %v263 = vadd.f32 %v255, %v262
    %v264 = vadd.f32 %v259, %v263
    %s265 = sld [smem:[#allocation3 + $0x7b]]
    %v266 = vstv %s265
    %v267 = vadd.f32 %v264, %v266
    %v268 = vmax.f32 %v267, 0.0
    %s269 = sld [smem:[#allocation3 + $0x3c]]
    %v270 = vstv %s269
    %v271 = vmul.f32 %v270, %v33
    %s272 = sld [smem:[#allocation3 + $0x3d]]
    %v273 = vstv %s272
    %v274 = vmul.f32 %v273, %v40
    %s275 = sld [smem:[#allocation3 + $0x3e]]
    %v276 = vstv %s275
    %v277 = vmul.f32 %v276, %v47
    %v278 = vadd.f32 %v271, %v277
    %s279 = sld [smem:[#allocation3 + $0x3f]]
    %v280 = vstv %s279
    %v281 = vmul.f32 %v280, %v54
    %v282 = vadd.f32 %v274, %v281
    %s283 = sld [smem:[#allocation3 + $0x40]]
    %v284 = vstv %s283
    %v285 = vmul.f32 %v284, %v61
    %v286 = vadd.f32 %v278, %v285
    %s287 = sld [smem:[#allocation3 + $0x41]]
    %v288 = vstv %s287
    %v289 = vmul.f32 %v288, %v68
    %v290 = vadd.f32 %v282, %v289
    %s291 = sld [smem:[#allocation3 + $0x42]]
    %v292 = vstv %s291
    %v293 = vmul.f32 %v292, %v75
    %v294 = vadd.f32 %v286, %v293
    %s295 = sld [smem:[#allocation3 + $0x43]]
    %v296 = vstv %s295
    %v297 = vmul.f32 %v296, %v82
    %v298 = vadd.f32 %v290, %v297
    %s299 = sld [smem:[#allocation3 + $0x44]]
    %v300 = vstv %s299
    %v301 = vmul.f32 %v300, %v89
    %v302 = vadd.f32 %v294, %v301
    %s303 = sld [smem:[#allocation3 + $0x45]]
    %v304 = vstv %s303
    %v305 = vmul.f32 %v304, %v96
    %v306 = vadd.f32 %v298, %v305
    %v307 = vadd.f32 %v302, %v306
    %s308 = sld [smem:[#allocation3 + $0x7c]]
    %v309 = vstv %s308
    %v310 = vadd.f32 %v307, %v309
    %v311 = vmax.f32 %v310, 0.0
    %s312 = sld [smem:[#allocation3 + $0x46]]
    %v313 = vstv %s312
    %v314 = vmul.f32 %v313, %v33
    %s315 = sld [smem:[#allocation3 + $0x47]]
    %v316 = vstv %s315
    %v317 = vmul.f32 %v316, %v40
    %s318 = sld [smem:[#allocation3 + $0x48]]
    %v319 = vstv %s318
    %v320 = vmul.f32 %v319, %v47
    %v321 = vadd.f32 %v314, %v320
    %s322 = sld [smem:[#allocation3 + $0x49]]
    %v323 = vstv %s322
    %v324 = vmul.f32 %v323, %v54
    %v325 = vadd.f32 %v317, %v324
    %s326 = sld [smem:[#allocation3 + $0x4a]]
    %v327 = vstv %s326
    %v328 = vmul.f32 %v327, %v61
    %v329 = vadd.f32 %v321, %v328
    %s330 = sld [smem:[#allocation3 + $0x4b]]
    %v331 = vstv %s330
    %v332 = vmul.f32 %v331, %v68
    %v333 = vadd.f32 %v325, %v332
    %s334 = sld [smem:[#allocation3 + $0x4c]]
    %v335 = vstv %s334
    %v336 = vmul.f32 %v335, %v75
    %v337 = vadd.f32 %v329, %v336
    %s338 = sld [smem:[#allocation3 + $0x4d]]
    %v339 = vstv %s338
    %v340 = vmul.f32 %v339, %v82
    %v341 = vadd.f32 %v333, %v340
    %s342 = sld [smem:[#allocation3 + $0x4e]]
    %v343 = vstv %s342
    %v344 = vmul.f32 %v343, %v89
    %v345 = vadd.f32 %v337, %v344
    %s346 = sld [smem:[#allocation3 + $0x4f]]
    %v347 = vstv %s346
    %v348 = vmul.f32 %v347, %v96
    %v349 = vadd.f32 %v341, %v348
    %v350 = vadd.f32 %v345, %v349
    %s351 = sld [smem:[#allocation3 + $0x7d]]
    %v352 = vstv %s351
    %v353 = vadd.f32 %v350, %v352
    %v354 = vmax.f32 %v353, 0.0
    %s355 = sld [smem:[#allocation3 + $0x50]]
    %v356 = vstv %s355
    %v357 = vmul.f32 %v356, %v33
    %s358 = sld [smem:[#allocation3 + $0x51]]
    %v359 = vstv %s358
    %v360 = vmul.f32 %v359, %v40
    %s361 = sld [smem:[#allocation3 + $0x52]]
    %v362 = vstv %s361
    %v363 = vmul.f32 %v362, %v47
    %v364 = vadd.f32 %v357, %v363
    %s365 = sld [smem:[#allocation3 + $0x53]]
    %v366 = vstv %s365
    %v367 = vmul.f32 %v366, %v54
    %v368 = vadd.f32 %v360, %v367
    %s369 = sld [smem:[#allocation3 + $0x54]]
    %v370 = vstv %s369
    %v371 = vmul.f32 %v370, %v61
    %v372 = vadd.f32 %v364, %v371
    %s373 = sld [smem:[#allocation3 + $0x55]]
    %v374 = vstv %s373
    %v375 = vmul.f32 %v374, %v68
    %v376 = vadd.f32 %v368, %v375
    %s377 = sld [smem:[#allocation3 + $0x56]]
    %v378 = vstv %s377
    %v379 = vmul.f32 %v378, %v75
    %v380 = vadd.f32 %v372, %v379
    %s381 = sld [smem:[#allocation3 + $0x57]]
    %v382 = vstv %s381
    %v383 = vmul.f32 %v382, %v82
    %v384 = vadd.f32 %v376, %v383
    %s385 = sld [smem:[#allocation3 + $0x58]]
    %v386 = vstv %s385
    %v387 = vmul.f32 %v386, %v89
    %v388 = vadd.f32 %v380, %v387
    %s389 = sld [smem:[#allocation3 + $0x59]]
    %v390 = vstv %s389
    %v391 = vmul.f32 %v390, %v96
    %v392 = vadd.f32 %v384, %v391
    %v393 = vadd.f32 %v388, %v392
    %s394 = sld [smem:[#allocation3 + $0x7e]]
    %v395 = vstv %s394
    %v396 = vadd.f32 %v393, %v395
    %v397 = vmax.f32 %v396, 0.0
    %s398 = sld [smem:[#allocation3 + $0x5a]]
    %v399 = vstv %s398
    %v400 = vmul.f32 %v399, %v33
    %s401 = sld [smem:[#allocation3 + $0x5b]]
    %v402 = vstv %s401
    %v403 = vmul.f32 %v402, %v40
    %s404 = sld [smem:[#allocation3 + $0x5c]]
    %v405 = vstv %s404
    %v406 = vmul.f32 %v405, %v47
    %v407 = vadd.f32 %v400, %v406
    %s408 = sld [smem:[#allocation3 + $0x5d]]
    %v409 = vstv %s408
    %v410 = vmul.f32 %v409, %v54
    %v411 = vadd.f32 %v403, %v410
    %s412 = sld [smem:[#allocation3 + $0x5e]]
    %v413 = vstv %s412
    %v414 = vmul.f32 %v413, %v61
    %v415 = vadd.f32 %v407, %v414
    %s416 = sld [smem:[#allocation3 + $0x5f]]
    %v417 = vstv %s416
    %v418 = vmul.f32 %v417, %v68
    %v419 = vadd.f32 %v411, %v418
    %s420 = sld [smem:[#allocation3 + $0x60]]
    %v421 = vstv %s420
    %v422 = vmul.f32 %v421, %v75
    %v423 = vadd.f32 %v415, %v422
    %s424 = sld [smem:[#allocation3 + $0x61]]
    %v425 = vstv %s424
    %v426 = vmul.f32 %v425, %v82
    %v427 = vadd.f32 %v419, %v426
    %s428 = sld [smem:[#allocation3 + $0x62]]
    %v429 = vstv %s428
    %v430 = vmul.f32 %v429, %v89
    %v431 = vadd.f32 %v423, %v430
    %s432 = sld [smem:[#allocation3 + $0x63]]
    %v433 = vstv %s432
    %v434 = vmul.f32 %v433, %v96
    %v435 = vadd.f32 %v427, %v434
    %v436 = vadd.f32 %v431, %v435
    %s437 = sld [smem:[#allocation3 + $0x7f]]
    %v438 = vstv %s437
    %v439 = vadd.f32 %v436, %v438
    %v440 = vmax.f32 %v439, 0.0
    %s441 = sld [smem:[#allocation3 + $0x64]]
    %v442 = vstv %s441
    %v443 = vmul.f32 %v442, %v33
    %s444 = sld [smem:[#allocation3 + $0x65]]
    %v445 = vstv %s444
    %v446 = vmul.f32 %v445, %v40
    %s447 = sld [smem:[#allocation3 + $0x66]]
    %v448 = vstv %s447
    %v449 = vmul.f32 %v448, %v47
    %v450 = vadd.f32 %v443, %v449
    %s451 = sld [smem:[#allocation3 + $0x67]]
    %v452 = vstv %s451
    %v453 = vmul.f32 %v452, %v54
    %v454 = vadd.f32 %v446, %v453
    %s455 = sld [smem:[#allocation3 + $0x68]]
    %v456 = vstv %s455
    %v457 = vmul.f32 %v456, %v61
    %v458 = vadd.f32 %v450, %v457
    %s459 = sld [smem:[#allocation3 + $0x69]]
    %v460 = vstv %s459
    %v461 = vmul.f32 %v460, %v68
    %v462 = vadd.f32 %v454, %v461
    %s463 = sld [smem:[#allocation3 + $0x6a]]
    %v464 = vstv %s463
    %v465 = vmul.f32 %v464, %v75
    %v466 = vadd.f32 %v458, %v465
    %s467 = sld [smem:[#allocation3 + $0x6b]]
    %v468 = vstv %s467
    %v469 = vmul.f32 %v468, %v82
    %v470 = vadd.f32 %v462, %v469
    %s471 = sld [smem:[#allocation3 + $0x6c]]
    %v472 = vstv %s471
    %v473 = vmul.f32 %v472, %v89
    %v474 = vadd.f32 %v466, %v473
    %s475 = sld [smem:[#allocation3 + $0x6d]]
    %v476 = vstv %s475
    %v477 = vmul.f32 %v476, %v96
    %v478 = vadd.f32 %v470, %v477
    %v479 = vadd.f32 %v474, %v478
    %s480 = sld [smem:[#allocation3 + $0x80]]
    %v481 = vstv %s480
    %v482 = vadd.f32 %v479, %v481
    %v483 = vmax.f32 %v482, 0.0
    %s484 = sld [smem:[#allocation3 + $0x6e]]
    %v485 = vstv %s484
    %v486 = vmul.f32 %v485, %v33
    %s487 = sld [smem:[#allocation3 + $0x6f]]
    %v488 = vstv %s487
    %v489 = vmul.f32 %v488, %v40
    %s490 = sld [smem:[#allocation3 + $0x70]]
    %v491 = vstv %s490
    %v492 = vmul.f32 %v491, %v47
    %v493 = vadd.f32 %v486, %v492
    %s494 = sld [smem:[#allocation3 + $0x71]]
    %v495 = vstv %s494
    %v496 = vmul.f32 %v495, %v54
    %v497 = vadd.f32 %v489, %v496
    %s498 = sld [smem:[#allocation3 + $0x72]]
    %v499 = vstv %s498
    %v500 = vmul.f32 %v499, %v61
    %v501 = vadd.f32 %v493, %v500
    %s502 = sld [smem:[#allocation3 + $0x73]]
    %v503 = vstv %s502
    %v504 = vmul.f32 %v503, %v68
    %v505 = vadd.f32 %v497, %v504
    %s506 = sld [smem:[#allocation3 + $0x74]]
    %v507 = vstv %s506
    %v508 = vmul.f32 %v507, %v75
    %v509 = vadd.f32 %v501, %v508
    %s510 = sld [smem:[#allocation3 + $0x75]]
    %v511 = vstv %s510
    %v512 = vmul.f32 %v511, %v82
    %v513 = vadd.f32 %v505, %v512
    %s514 = sld [smem:[#allocation3 + $0x76]]
    %v515 = vstv %s514
    %v516 = vmul.f32 %v515, %v89
    %v517 = vadd.f32 %v509, %v516
    %s518 = sld [smem:[#allocation3 + $0x77]]
    %v519 = vstv %s518
    %v520 = vmul.f32 %v519, %v96
    %v521 = vadd.f32 %v513, %v520
    %v522 = vadd.f32 %v517, %v521
    %s523 = sld [smem:[#allocation3 + $0x81]]
    %v524 = vstv %s523
    %v525 = vadd.f32 %v522, %v524
    %v526 = vmax.f32 %v525, 0.0
    %s527 = sld [smem:[#allocation3 + $0x82]]
    %v528 = vstv %s527
    %v529 = vmul.f32 %v528, %v139
    %s530 = sld [smem:[#allocation3 + $0x83]]
    %v531 = vstv %s530
    %v532 = vmul.f32 %v531, %v182
    %s533 = sld [smem:[#allocation3 + $0x84]]
    %v534 = vstv %s533
    %v535 = vmul.f32 %v534, %v225
    %v536 = vadd.f32 %v529, %v535
    %s537 = sld [smem:[#allocation3 + $0x85]]
    %v538 = vstv %s537
    %v539 = vmul.f32 %v538, %v268
    %v540 = vadd.f32 %v532, %v539
    %s541 = sld [smem:[#allocation3 + $0x86]]
    %v542 = vstv %s541
    %v543 = vmul.f32 %v542, %v311
    %v544 = vadd.f32 %v536, %v543
    %s545 = sld [smem:[#allocation3 + $0x87]]
    %v546 = vstv %s545
    %v547 = vmul.f32 %v546, %v354
    %v548 = vadd.f32 %v540, %v547
    %s549 = sld [smem:[#allocation3 + $0x88]]
    %v550 = vstv %s549
    %v551 = vmul.f32 %v550, %v397
    %v552 = vadd.f32 %v544, %v551
    %s553 = sld [smem:[#allocation3 + $0x89]]
    %v554 = vstv %s553
    %v555 = vmul.f32 %v554, %v440
    %v556 = vadd.f32 %v548, %v555
    %s557 = sld [smem:[#allocation3 + $0x8a]]
    %v558 = vstv %s557
    %v559 = vmul.f32 %v558, %v483
    %v560 = vadd.f32 %v552, %v559
    %s561 = sld [smem:[#allocation3 + $0x8b]]
    %v562 = vstv %s561
    %v563 = vmul.f32 %v562, %v526
    %v564 = vadd.f32 %v556, %v563
    %v565 = vadd.f32 %v560, %v564
    %s566 = sld [smem:[#allocation3 + $0x8c]]
    %v567 = vstv %s566
    %v568 = vadd.f32 %v565, %v567
    %569 = vst [vmem:[#allocation7] sm:$0xff] %v568
    // Predicated region
    $region10: #{tpu_custom_call.1} parent=1 // pred_check
      _
    $region11: #{tpu_custom_call.1} parent=1 // pred_check_branch
      %571 = sbr.rel (0) target = $region13
    $region12: #{tpu_custom_call.1} parent=1 // pred_region
      %s573 = ssub.s32 128, 128
      %574 = vsyncadd [#allocation6], %s573
      %s576 = sshll.u32 [#allocation7], 4
      %s577 = int_to_ptr.vmem [resolvable:$true] %s576
      %579 = dma.vmem_to_hbm [thread:$0]  %s577, 128, %s2, [#allocation6]
    $region13: #{tpu_custom_call.1} parent=1 // pred_fallthru
      _
    // Predicated region
    $region14: #{tpu_custom_call.1} parent=1 // pred_check
      _
    $region15: #{tpu_custom_call.1} parent=1 // pred_check_branch
      %581 = sbr.rel (0) target = $region17
    $region16: #{tpu_custom_call.1} parent=1 // pred_region
      %582 = dma.done [#allocation6], 128
    $region17: #{tpu_custom_call.1} parent=1 // pred_fallthru
      _
    %583 = vsyncpa [#allocation5], 1
    %584 = vsyncpa [#allocation6], 1

</llo_original>
